<compile_context>
chip_gen: v5e
topology: v5e:2x2
jax: 0.10.0
libtpu: 0.0.40
codegen_flags: <defaults>
</compile_context>

<pallas_src>
import functools

import jax
import jax.numpy as jnp
from jax.experimental import pallas as pl
from jax.experimental.pallas import tpu as pltpu


def _round_up(n, m):
    return ((n + m - 1) // m) * m


def _pad2(a, rows, cols):
    r, c = a.shape
    return jnp.pad(a, ((0, rows - r), (0, cols - c)))


# ----------------------------------------------------------------------------- kernel


def _pr_linear_kernel(x_ref, w1_ref, b1_ref, w2_ref, b2_ref, w3_ref, b3_ref,
                      w4_ref, b4_ref, out_ref, *, skip):
    x = x_ref[...]                                        # (TB, C), input dtype

    def linear(h, w_ref, b_ref):
        # MXU matmul in the weights' dtype with f32 accumulation; bias add in f32.
        w = w_ref[...]
        return jnp.dot(h.astype(w.dtype), w,
                       preferred_element_type=jnp.float32) + b_ref[...]

    h = jnp.maximum(linear(x, w1_ref, b1_ref), 0.0)       # (TB, Hp) f32
    h = jnp.maximum(linear(h, w2_ref, b2_ref), 0.0)
    h = jnp.maximum(linear(h, w3_ref, b3_ref), 0.0)
    y = linear(h, w4_ref, b4_ref)                         # (TB, C) f32

    if skip:
        y = x.astype(jnp.float32) + y                     # identity skip, f32-exact x

    out_ref[...] = y.astype(out_ref.dtype)


# ----------------------------------------------------------------------------- wrapper


def prepare_params(params, compute_dtype=jnp.bfloat16):
    """One-time weight prep: PyTorch (out,in) -> (in,out), hidden dims padded to 128.

    Zero padding of the hidden axis is exact through bias-add + ReLU (padded lanes
    stay 0).  Input/output feature dims are left at their true width so activations
    need no padding at all.
    """
    (w1, b1), (w2, b2), (w3, b3), (w4, b4) = params
    H = w1.shape[0]            # hidden width (100 in the module)
    c_in = w1.shape[1]         # layer1 in_features  (= num_output_channels)
    c_out = w4.shape[0]        # layer4 out_features (= num_output_channels)
    hp = _round_up(H, 128)

    w1p = _pad2(jnp.transpose(w1), c_in, hp).astype(compute_dtype)   # (C,  Hp)
    w2p = _pad2(jnp.transpose(w2), hp, hp).astype(compute_dtype)     # (Hp, Hp)
    w3p = _pad2(jnp.transpose(w3), hp, hp).astype(compute_dtype)     # (Hp, Hp)
    w4p = _pad2(jnp.transpose(w4), hp, c_out).astype(compute_dtype)  # (Hp, C)
    b1p = _pad2(b1.reshape(1, -1), 1, hp).astype(jnp.float32)
    b2p = _pad2(b2.reshape(1, -1), 1, hp).astype(jnp.float32)
    b3p = _pad2(b3.reshape(1, -1), 1, hp).astype(jnp.float32)
    b4p = b4.reshape(1, -1).astype(jnp.float32)
    return (w1p, b1p, w2p, b2p, w3p, b3p, w4p, b4p)


def pr_linear(x, prepped, *, skip=True, tile_b=1024, out_dtype=None):
    """PRLinear forward as one Pallas kernel.  x: (B, C).  Returns (B, C)."""
    B, C = x.shape
    w1p, b1p, w2p, b2p, w3p, b3p, w4p, b4p = prepped
    hp = w2p.shape[0]
    assert w1p.shape == (C, hp) and w4p.shape == (hp, C)

    out_dtype = x.dtype if out_dtype is None else out_dtype

    # Batch tile: multiple of 8; clamp so there are >=2 grid steps when B allows
    # (keeps both v7x TensorCores busy) while still amortizing per-step overhead.
    tb = _round_up(min(int(tile_b), max(pl.cdiv(B, 2), 8)), 8)
    grid = (pl.cdiv(B, tb),)            # partial last block handled by Pallas masking

    resident = lambda i: (0, 0)         # weights/biases stay resident across the grid

    return pl.pallas_call(
        functools.partial(_pr_linear_kernel, skip=skip),
        out_shape=jax.ShapeDtypeStruct((B, C), out_dtype),
        grid_spec=pltpu.PrefetchScalarGridSpec(
            num_scalar_prefetch=0,
            grid=grid,
            in_specs=[
                pl.BlockSpec((tb, C), lambda i: (i, 0)),   # x tile (pipelined)
                pl.BlockSpec((C, hp), resident),           # w1
                pl.BlockSpec((1, hp), resident),           # b1
                pl.BlockSpec((hp, hp), resident),          # w2
                pl.BlockSpec((1, hp), resident),           # b2
                pl.BlockSpec((hp, hp), resident),          # w3
                pl.BlockSpec((1, hp), resident),           # b3
                pl.BlockSpec((hp, C), resident),           # w4
                pl.BlockSpec((1, C), resident),            # b4
            ],
            out_specs=pl.BlockSpec((tb, C), lambda i: (i, 0)),
        ),
        compiler_params=pltpu.CompilerParams(
            dimension_semantics=("parallel",)),
    )(x, w1p, b1p, w2p, b2p, w3p, b3p, w4p, b4p)


# ----------------------------------------------------------------------------- reference / init


def init_params(key, num_output_channels=100):
    """PyTorch nn.Linear-style init: U(-1/sqrt(fan_in), 1/sqrt(fan_in))."""
    dims = [
        (100, num_output_channels),   # layer1: Linear(num_output_channels, 100)
        (100, 100),                   # layer2
        (100, 100),                   # layer3
        (num_output_channels, 100),   # layer4
    ]
    params = []
    for out_f, in_f in dims:
        key, kw, kb = jax.random.split(key, 3)
        bound = 1.0 / jnp.sqrt(jnp.float32(in_f))
        w = jax.random.uniform(kw, (out_f, in_f), jnp.float32, -bound, bound)
        b = jax.random.uniform(kb, (out_f,), jnp.float32, -bound, bound)
        params.append((w, b))
    return tuple(params)


def reference_forward(x, params, skip=True):
    (w1, b1), (w2, b2), (w3, b3), (w4, b4) = params
    h = jnp.maximum(x @ w1.T + b1, 0.0)
    h = jnp.maximum(h @ w2.T + b2, 0.0)
    h = jnp.maximum(h @ w3.T + b3, 0.0)
    y = h @ w4.T + b4
    return x + y if skip else y


if __name__ == "__main__":
    C = 100   # num_output_channels (module default); hidden width is fixed at 100

    key = jax.random.PRNGKey(0)
    key, kx1, kx2 = jax.random.split(key, 3)
    params = init_params(jax.random.PRNGKey(0), num_output_channels=C)

    # One-time weight prep (hoisted out of the per-call path).
    prepped_f32 = prepare_params(params, compute_dtype=jnp.float32)
    prepped_bf16 = prepare_params(params, compute_dtype=jnp.bfloat16)   # default path

    fwd_f32 = jax.jit(functools.partial(pr_linear, prepped=prepped_f32))
    fwd_f32_noskip = jax.jit(functools.partial(pr_linear, prepped=prepped_f32, skip=False))
    fwd_bf16 = jax.jit(functools.partial(pr_linear, prepped=prepped_bf16))

    # Small batch (single grid step), f32 weights — exact module semantics.
    x_small = jax.random.normal(kx1, (8, C), jnp.float32)
    out = fwd_f32(x_small)
    jax.block_until_ready(out)
    assert out.shape == (8, C)
    assert jnp.allclose(out, reference_forward(x_small, params), atol=1e-4, rtol=1e-4)

    # skip=False branch.
    out_ns = fwd_f32_noskip(x_small)
    jax.block_until_ready(out_ns)
    assert jnp.allclose(out_ns, reference_forward(x_small, params, skip=False),
                        atol=1e-4, rtol=1e-4)

    # Non-multiple-of-tile batch: exercises >=2 grid steps + masked partial block.
    x_big = jax.random.normal(kx2, (300, C), jnp.float32)
    out_big = fwd_f32(x_big)
    jax.block_until_ready(out_big)
    assert out_big.shape == (300, C)
    assert jnp.allclose(out_big, reference_forward(x_big, params), atol=1e-4, rtol=1e-4)

    # bf16-weight default path (MXU-native on v5e/v6e/v7x); f32 accumulation, skip
    # uses the un-quantized f32 input.
    out_bf16 = fwd_bf16(x_big)
    jax.block_until_ready(out_bf16)
    assert jnp.allclose(out_bf16, reference_forward(x_big, params), atol=5e-2, rtol=5e-2)

    print("KERNEL_OK")
</pallas_src>

<mosaic_0001>
module attributes {stable_mosaic.version = 11 : i64} {
  func.func @_pr_linear_kernel(%arg0: i32, %arg1: memref<8x100xf32, #tpu.memory_space<vmem>>, %arg2: memref<100x128xf32, #tpu.memory_space<vmem>>, %arg3: memref<1x128xf32, #tpu.memory_space<vmem>>, %arg4: memref<128x128xf32, #tpu.memory_space<vmem>>, %arg5: memref<1x128xf32, #tpu.memory_space<vmem>>, %arg6: memref<128x128xf32, #tpu.memory_space<vmem>>, %arg7: memref<1x128xf32, #tpu.memory_space<vmem>>, %arg8: memref<128x100xf32, #tpu.memory_space<vmem>>, %arg9: memref<1x100xf32, #tpu.memory_space<vmem>>, %arg10: memref<8x100xf32, #tpu.memory_space<vmem>>) attributes {dimension_semantics = [#tpu.dimension_semantics<parallel>], iteration_bounds = array<i64: 1>, scalar_prefetch = 0 : i64, scratch_operands = 0 : i64, tpu.core_type = #tpu.core_type<tc>, window_params = [{transform_indices = @transform_0, window_bounds = array<i64: 8, 100>}, {pipeline_mode = #tpu.pipeline_mode<synchronous>, transform_indices = @transform_1, window_bounds = array<i64: 100, 128>}, {pipeline_mode = #tpu.pipeline_mode<synchronous>, transform_indices = @transform_2, window_bounds = array<i64: 1, 128>}, {pipeline_mode = #tpu.pipeline_mode<synchronous>, transform_indices = @transform_3, window_bounds = array<i64: 128, 128>}, {pipeline_mode = #tpu.pipeline_mode<synchronous>, transform_indices = @transform_4, window_bounds = array<i64: 1, 128>}, {pipeline_mode = #tpu.pipeline_mode<synchronous>, transform_indices = @transform_5, window_bounds = array<i64: 128, 128>}, {pipeline_mode = #tpu.pipeline_mode<synchronous>, transform_indices = @transform_6, window_bounds = array<i64: 1, 128>}, {pipeline_mode = #tpu.pipeline_mode<synchronous>, transform_indices = @transform_7, window_bounds = array<i64: 128, 100>}, {pipeline_mode = #tpu.pipeline_mode<synchronous>, transform_indices = @transform_8, window_bounds = array<i64: 1, 100>}, {transform_indices = @transform_9, window_bounds = array<i64: 8, 100>}]} {
    %c0 = arith.constant 0 : index
    %c0_0 = arith.constant 0 : index
    %0 = vector.load %arg1[%c0, %c0_0] : memref<8x100xf32, #tpu.memory_space<vmem>>, vector<8x100xf32>
    %c0_1 = arith.constant 0 : index
    %c0_2 = arith.constant 0 : index
    %1 = vector.load %arg2[%c0_1, %c0_2] : memref<100x128xf32, #tpu.memory_space<vmem>>, vector<100x128xf32>
    %cst = arith.constant dense<0.000000e+00> : vector<8x128xf32>
    %2 = tpu.matmul %0, %1, %cst {dimension_numbers = #tpu.dot_dimension_numbers<[1], [0], [0], [1], [0, 0, 1, 1], [], []>} : vector<8x100xf32>, vector<100x128xf32>, vector<8x128xf32> -> vector<8x128xf32>
    %c0_3 = arith.constant 0 : index
    %c0_4 = arith.constant 0 : index
    %3 = vector.load %arg3[%c0_3, %c0_4] : memref<1x128xf32, #tpu.memory_space<vmem>>, vector<1x128xf32>
    %4 = vector.broadcast %3 : vector<1x128xf32> to vector<8x128xf32>
    %5 = arith.addf %2, %4 : vector<8x128xf32>
    %cst_5 = arith.constant 0.000000e+00 : f32
    %6 = vector.broadcast %cst_5 : f32 to vector<8x128xf32>
    %7 = arith.maximumf %5, %6 : vector<8x128xf32>
    %c0_6 = arith.constant 0 : index
    %c0_7 = arith.constant 0 : index
    %8 = vector.load %arg4[%c0_6, %c0_7] : memref<128x128xf32, #tpu.memory_space<vmem>>, vector<128x128xf32>
    %cst_8 = arith.constant dense<0.000000e+00> : vector<8x128xf32>
    %9 = tpu.matmul %7, %8, %cst_8 {dimension_numbers = #tpu.dot_dimension_numbers<[1], [0], [0], [1], [0, 0, 1, 1], [], []>} : vector<8x128xf32>, vector<128x128xf32>, vector<8x128xf32> -> vector<8x128xf32>
    %c0_9 = arith.constant 0 : index
    %c0_10 = arith.constant 0 : index
    %10 = vector.load %arg5[%c0_9, %c0_10] : memref<1x128xf32, #tpu.memory_space<vmem>>, vector<1x128xf32>
    %11 = vector.broadcast %10 : vector<1x128xf32> to vector<8x128xf32>
    %12 = arith.addf %9, %11 : vector<8x128xf32>
    %cst_11 = arith.constant 0.000000e+00 : f32
    %13 = vector.broadcast %cst_11 : f32 to vector<8x128xf32>
    %14 = arith.maximumf %12, %13 : vector<8x128xf32>
    %c0_12 = arith.constant 0 : index
    %c0_13 = arith.constant 0 : index
    %15 = vector.load %arg6[%c0_12, %c0_13] : memref<128x128xf32, #tpu.memory_space<vmem>>, vector<128x128xf32>
    %cst_14 = arith.constant dense<0.000000e+00> : vector<8x128xf32>
    %16 = tpu.matmul %14, %15, %cst_14 {dimension_numbers = #tpu.dot_dimension_numbers<[1], [0], [0], [1], [0, 0, 1, 1], [], []>} : vector<8x128xf32>, vector<128x128xf32>, vector<8x128xf32> -> vector<8x128xf32>
    %c0_15 = arith.constant 0 : index
    %c0_16 = arith.constant 0 : index
    %17 = vector.load %arg7[%c0_15, %c0_16] : memref<1x128xf32, #tpu.memory_space<vmem>>, vector<1x128xf32>
    %18 = vector.broadcast %17 : vector<1x128xf32> to vector<8x128xf32>
    %19 = arith.addf %16, %18 : vector<8x128xf32>
    %cst_17 = arith.constant 0.000000e+00 : f32
    %20 = vector.broadcast %cst_17 : f32 to vector<8x128xf32>
    %21 = arith.maximumf %19, %20 : vector<8x128xf32>
    %c0_18 = arith.constant 0 : index
    %c0_19 = arith.constant 0 : index
    %22 = vector.load %arg8[%c0_18, %c0_19] : memref<128x100xf32, #tpu.memory_space<vmem>>, vector<128x100xf32>
    %cst_20 = arith.constant dense<0.000000e+00> : vector<8x100xf32>
    %23 = tpu.matmul %21, %22, %cst_20 {dimension_numbers = #tpu.dot_dimension_numbers<[1], [0], [0], [1], [0, 0, 1, 1], [], []>} : vector<8x128xf32>, vector<128x100xf32>, vector<8x100xf32> -> vector<8x100xf32>
    %c0_21 = arith.constant 0 : index
    %c0_22 = arith.constant 0 : index
    %24 = vector.load %arg9[%c0_21, %c0_22] : memref<1x100xf32, #tpu.memory_space<vmem>>, vector<1x100xf32>
    %25 = vector.broadcast %24 : vector<1x100xf32> to vector<8x100xf32>
    %26 = arith.addf %23, %25 : vector<8x100xf32>
    %27 = arith.addf %0, %26 : vector<8x100xf32>
    %c0_23 = arith.constant 0 : index
    %c0_24 = arith.constant 0 : index
    %28 = vector.load %arg10[%c0_23, %c0_24] : memref<8x100xf32, #tpu.memory_space<vmem>>, vector<8x100xf32>
    tpu.vector_store %arg10[%c0_23, %c0_24], %27 {strides = array<i32>} : memref<8x100xf32, #tpu.memory_space<vmem>>, vector<8x100xf32>,
    return
  }
  func.func @transform_0(%arg0: i32) -> (i32, i32) {
    %c0_i32 = arith.constant 0 : i32
    %c0_i32_0 = arith.constant 0 : i32
    return %arg0, %c0_i32 : i32, i32
  }
  func.func @transform_1(%arg0: i32) -> (i32, i32) {
    %c0_i32 = arith.constant 0 : i32
    %c0_i32_0 = arith.constant 0 : i32
    %c0_i32_1 = arith.constant 0 : i32
    return %c0_i32, %c0_i32_0 : i32, i32
  }
  func.func @transform_2(%arg0: i32) -> (i32, i32) {
    %c0_i32 = arith.constant 0 : i32
    %c0_i32_0 = arith.constant 0 : i32
    %c0_i32_1 = arith.constant 0 : i32
    return %c0_i32, %c0_i32_0 : i32, i32
  }
  func.func @transform_3(%arg0: i32) -> (i32, i32) {
    %c0_i32 = arith.constant 0 : i32
    %c0_i32_0 = arith.constant 0 : i32
    %c0_i32_1 = arith.constant 0 : i32
    return %c0_i32, %c0_i32_0 : i32, i32
  }
  func.func @transform_4(%arg0: i32) -> (i32, i32) {
    %c0_i32 = arith.constant 0 : i32
    %c0_i32_0 = arith.constant 0 : i32
    %c0_i32_1 = arith.constant 0 : i32
    return %c0_i32, %c0_i32_0 : i32, i32
  }
  func.func @transform_5(%arg0: i32) -> (i32, i32) {
    %c0_i32 = arith.constant 0 : i32
    %c0_i32_0 = arith.constant 0 : i32
    %c0_i32_1 = arith.constant 0 : i32
    return %c0_i32, %c0_i32_0 : i32, i32
  }
  func.func @transform_6(%arg0: i32) -> (i32, i32) {
    %c0_i32 = arith.constant 0 : i32
    %c0_i32_0 = arith.constant 0 : i32
    %c0_i32_1 = arith.constant 0 : i32
    return %c0_i32, %c0_i32_0 : i32, i32
  }
  func.func @transform_7(%arg0: i32) -> (i32, i32) {
    %c0_i32 = arith.constant 0 : i32
    %c0_i32_0 = arith.constant 0 : i32
    %c0_i32_1 = arith.constant 0 : i32
    return %c0_i32, %c0_i32_0 : i32, i32
  }
  func.func @transform_8(%arg0: i32) -> (i32, i32) {
    %c0_i32 = arith.constant 0 : i32
    %c0_i32_0 = arith.constant 0 : i32
    %c0_i32_1 = arith.constant 0 : i32
    return %c0_i32, %c0_i32_0 : i32, i32
  }
  func.func @transform_9(%arg0: i32) -> (i32, i32) {
    %c0_i32 = arith.constant 0 : i32
    %c0_i32_0 = arith.constant 0 : i32
    return %arg0, %c0_i32 : i32, i32
  }
}

</mosaic_0001>

<llo_original>
// kernel: pr_linear.1
$region0: #{pr_linear.1}
  #allocation0 [shape = 'u32[]', space=smem, size = 0x4, offset = 0x4, fixed_abs, tag = 'smem constant byte address 0x4 - core index']
  #allocation1 [shape = 'u32[72,128]{1,0:T(1,128)}', space=vmem, size = 0x9000, scoped, tag = 'internal scratch']
  %s0 = inlined_call_operand.hbm [shape: f32[8,100], index: 0, kind: input, shape index: {}]
  %s1 = inlined_call_operand.hbm [shape: f32[100,128], index: 1, kind: input, shape index: {}]
  %s2 = inlined_call_operand.hbm [shape: f32[1,128], index: 2, kind: input, shape index: {}]
  %s3 = inlined_call_operand.hbm [shape: f32[128,128], index: 3, kind: input, shape index: {}]
  %s4 = inlined_call_operand.vmem [shape: f32[1,128], index: 4, kind: input, shape index: {}]
  %s5 = inlined_call_operand.hbm [shape: f32[128,128], index: 5, kind: input, shape index: {}]
  %s6 = inlined_call_operand.vmem [shape: f32[1,128], index: 6, kind: input, shape index: {}]
  %s7 = inlined_call_operand.hbm [shape: f32[128,100], index: 7, kind: input, shape index: {}]
  %s8 = inlined_call_operand.vmem [shape: f32[1,100], index: 8, kind: input, shape index: {}]
  %s9 = inlined_call_operand.hbm [shape: f32[8,100], index: 9, kind: output, shape index: {}]
  %s10 = sld [smem:[#allocation0]]
  $region70: #{pr_linear.1} parent=0
    _
  %s12 = ssub.s32 1, %s10
  %s13 = scalar_select 0, %s12, %s10
  $region1: #{pr_linear.1} parent=0
    #allocation2 [shape = 'u8[4096]{0}', space=vmem, size = 0x1000, scoped, tag = 'input window, operand 0, single buffered']
    #allocation3 [shape = 's32[1]{0}', space=sflag, size = 0x4, scoped, tag = 'scoped memory for pr_linear.1']
    #allocation4 [shape = 's32[1]{0}', space=sflag, size = 0x4, scoped, tag = 'scoped memory for pr_linear.1']
    #allocation5 [shape = 'u8[53248]{0}', space=vmem, size = 0xd000, scoped, tag = 'input window, operand 1, single buffered']
    #allocation6 [shape = 's32[1]{0}', space=sflag, size = 0x4, scoped, tag = 'scoped memory for pr_linear.1']
    #allocation7 [shape = 'u8[512]{0}', space=vmem, size = 0x400, scoped, tag = 'input window, operand 2, single buffered']
    #allocation8 [shape = 'u8[65536]{0}', space=vmem, size = 0x10000, scoped, tag = 'input window, operand 3, single buffered']
    #allocation9 [shape = 's32[1]{0}', space=sflag, size = 0x4, scoped, tag = 'scoped memory for pr_linear.1']
    #allocation10 [shape = 'u8[65536]{0}', space=vmem, size = 0x10000, scoped, tag = 'input window, operand 5, single buffered']
    #allocation11 [shape = 'u8[65536]{0}', space=vmem, size = 0x10000, scoped, tag = 'input window, operand 7, single buffered']
    #allocation12 [shape = 's32[1]{0}', space=sflag, size = 0x4, scoped, tag = 'scoped memory for pr_linear.1']
    #allocation13 [shape = 'u8[4096]{0}', space=vmem, size = 0x1000, scoped, tag = 'output window, operand 0, single buffered']
    %14 = vsyncpa [#allocation3], 0
    %15 = vsyncpa [#allocation6], 0
    %16 = vsyncpa [#allocation9], 0
    %17 = vsyncpa [#allocation12], 0
    %18 = vsyncpa [#allocation4], 0
    // Predicated region
    $region2: #{pr_linear.1} parent=1 // pred_check
      _
    $region3: #{pr_linear.1} parent=1 // pred_check_branch
      %20 = sbr.rel (0) target = $region5
    $region4: #{pr_linear.1} parent=1 // pred_region
      %22 = vsyncadd [#allocation3], 0
      %s24 = sshll.u32 %s0, 4
      %s25 = int_to_ptr.hbm [resolvable:$true] %s24
      %s26 = sshll.u32 [#allocation2], 4
      %s27 = int_to_ptr.vmem [resolvable:$true] %s26
      %29 = dma.hbm_to_vmem [thread:$0]  %s25, 128, %s27, [#allocation3]
    $region5: #{pr_linear.1} parent=1 // pred_fallthru
      _
    // Predicated region
    $region6: #{pr_linear.1} parent=1 // pred_check
      _
    $region7: #{pr_linear.1} parent=1 // pred_check_branch
      %31 = sbr.rel (0) target = $region9
    $region8: #{pr_linear.1} parent=1 // pred_region
      %33 = vsyncadd [#allocation6], 0
      %s34 = sshll.u32 %s1, 4
      %s35 = int_to_ptr.hbm [resolvable:$true] %s34
      %s36 = sshll.u32 [#allocation5], 4
      %s37 = int_to_ptr.vmem [resolvable:$true] %s36
      %42 = dma.hbm_to_vmem [thread:$0]  %s35, 1664, %s37, [#allocation6], 128, 128, 8
    $region9: #{pr_linear.1} parent=1 // pred_fallthru
      _
    // Predicated region
    $region10: #{pr_linear.1} parent=1 // pred_check
      _
    $region11: #{pr_linear.1} parent=1 // pred_check_branch
      %44 = sbr.rel (0) target = $region13
    $region12: #{pr_linear.1} parent=1 // pred_region
      %46 = vsyncadd [#allocation6], 0
      %s48 = sshll.u32 %s2, 4
      %s49 = int_to_ptr.hbm [resolvable:$true] %s48
      %s50 = sshll.u32 [#allocation7], 4
      %s51 = int_to_ptr.vmem [resolvable:$true] %s50
      %53 = dma.hbm_to_vmem [thread:$0]  %s49, 16, %s51, [#allocation6]
    $region13: #{pr_linear.1} parent=1 // pred_fallthru
      _
    // Predicated region
    $region14: #{pr_linear.1} parent=1 // pred_check
      _
    $region15: #{pr_linear.1} parent=1 // pred_check_branch
      %55 = sbr.rel (0) target = $region17
    $region16: #{pr_linear.1} parent=1 // pred_region
      %57 = vsyncadd [#allocation9], 0
      %s58 = sshll.u32 %s3, 4
      %s59 = int_to_ptr.hbm [resolvable:$true] %s58
      %s60 = sshll.u32 [#allocation8], 4
      %s61 = int_to_ptr.vmem [resolvable:$true] %s60
      %66 = dma.hbm_to_vmem [thread:$0]  %s59, 2048, %s61, [#allocation9], 128, 128, 8
    $region17: #{pr_linear.1} parent=1 // pred_fallthru
      _
    // Predicated region
    $region18: #{pr_linear.1} parent=1 // pred_check
      _
    $region19: #{pr_linear.1} parent=1 // pred_check_branch
      %68 = sbr.rel (0) target = $region21
    $region20: #{pr_linear.1} parent=1 // pred_region
      _
    $region21: #{pr_linear.1} parent=1 // pred_fallthru
      _
    // Predicated region
    $region22: #{pr_linear.1} parent=1 // pred_check
      _
    $region23: #{pr_linear.1} parent=1 // pred_check_branch
      %70 = sbr.rel (0) target = $region25
    $region24: #{pr_linear.1} parent=1 // pred_region
      %72 = vsyncadd [#allocation9], 0
      %s73 = sshll.u32 %s5, 4
      %s74 = int_to_ptr.hbm [resolvable:$true] %s73
      %s75 = sshll.u32 [#allocation10], 4
      %s76 = int_to_ptr.vmem [resolvable:$true] %s75
      %81 = dma.hbm_to_vmem [thread:$0]  %s74, 2048, %s76, [#allocation9], 128, 128, 8
    $region25: #{pr_linear.1} parent=1 // pred_fallthru
      _
    // Predicated region
    $region26: #{pr_linear.1} parent=1 // pred_check
      _
    $region27: #{pr_linear.1} parent=1 // pred_check_branch
      %83 = sbr.rel (0) target = $region29
    $region28: #{pr_linear.1} parent=1 // pred_region
      _
    $region29: #{pr_linear.1} parent=1 // pred_fallthru
      _
    // Predicated region
    $region30: #{pr_linear.1} parent=1 // pred_check
      _
    $region31: #{pr_linear.1} parent=1 // pred_check_branch
      %85 = sbr.rel (0) target = $region33
    $region32: #{pr_linear.1} parent=1 // pred_region
      %87 = vsyncadd [#allocation12], 0
      %s88 = sshll.u32 %s7, 4
      %s89 = int_to_ptr.hbm [resolvable:$true] %s88
      %s90 = sshll.u32 [#allocation11], 4
      %s91 = int_to_ptr.vmem [resolvable:$true] %s90
      %96 = dma.hbm_to_vmem [thread:$0]  %s89, 2048, %s91, [#allocation12], 128, 128, 8
    $region33: #{pr_linear.1} parent=1 // pred_fallthru
      _
    // Predicated region
    $region34: #{pr_linear.1} parent=1 // pred_check
      _
    $region35: #{pr_linear.1} parent=1 // pred_check_branch
      %98 = sbr.rel (0) target = $region37
    $region36: #{pr_linear.1} parent=1 // pred_region
      _
    $region37: #{pr_linear.1} parent=1 // pred_fallthru
      _
    // Predicated region
    $region38: #{pr_linear.1} parent=1 // pred_check
      _
    $region39: #{pr_linear.1} parent=1 // pred_check_branch
      %100 = sbr.rel (0) target = $region41
    $region40: #{pr_linear.1} parent=1 // pred_region
      %102 = dma.done [#allocation3], 128
    $region41: #{pr_linear.1} parent=1 // pred_fallthru
      _
    // Predicated region
    $region42: #{pr_linear.1} parent=1 // pred_check
      _
    $region43: #{pr_linear.1} parent=1 // pred_check_branch
      %104 = sbr.rel (0) target = $region45
    $region44: #{pr_linear.1} parent=1 // pred_region
      %106 = dma.done [#allocation6], 1664
    $region45: #{pr_linear.1} parent=1 // pred_fallthru
      _
    // Predicated region
    $region46: #{pr_linear.1} parent=1 // pred_check
      _
    $region47: #{pr_linear.1} parent=1 // pred_check_branch
      %108 = sbr.rel (0) target = $region49
    $region48: #{pr_linear.1} parent=1 // pred_region
      %110 = dma.done [#allocation6], 16
    $region49: #{pr_linear.1} parent=1 // pred_fallthru
      _
    // Predicated region
    $region50: #{pr_linear.1} parent=1 // pred_check
      _
    $region51: #{pr_linear.1} parent=1 // pred_check_branch
      %112 = sbr.rel (0) target = $region53
    $region52: #{pr_linear.1} parent=1 // pred_region
      %114 = dma.done [#allocation9], 2048
    $region53: #{pr_linear.1} parent=1 // pred_fallthru
      _
    // Predicated region
    $region54: #{pr_linear.1} parent=1 // pred_check
      _
    $region55: #{pr_linear.1} parent=1 // pred_check_branch
      %116 = sbr.rel (0) target = $region57
    $region56: #{pr_linear.1} parent=1 // pred_region
      %118 = dma.done [#allocation9], 2048
    $region57: #{pr_linear.1} parent=1 // pred_fallthru
      _
    // Predicated region
    $region58: #{pr_linear.1} parent=1 // pred_check
      _
    $region59: #{pr_linear.1} parent=1 // pred_check_branch
      %120 = sbr.rel (0) target = $region61
    $region60: #{pr_linear.1} parent=1 // pred_region
      %122 = dma.done [#allocation12], 2048
    $region61: #{pr_linear.1} parent=1 // pred_fallthru
      _
    %v123 = vld [vmem:[#allocation2] sm:$0xff]
    %v124 = vld [vmem:[#allocation5] sm:$0xff]
    %v125 = vld [vmem:[#allocation5 + $0x8] sm:$0xff]
    %v126 = vld [vmem:[#allocation5 + $0x10] sm:$0xff]
    %v127 = vld [vmem:[#allocation5 + $0x18] sm:$0xff]
    %v128 = vld [vmem:[#allocation5 + $0x20] sm:$0xff]
    %v129 = vld [vmem:[#allocation5 + $0x28] sm:$0xff]
    %v130 = vld [vmem:[#allocation5 + $0x30] sm:$0xff]
    %v131 = vld [vmem:[#allocation5 + $0x38] sm:$0xff]
    %v132 = vld [vmem:[#allocation5 + $0x40] sm:$0xff]
    %v133 = vld [vmem:[#allocation5 + $0x48] sm:$0xff]
    %v134 = vld [vmem:[#allocation5 + $0x50] sm:$0xff]
    %v135 = vld [vmem:[#allocation5 + $0x58] sm:$0xff]
    %v136 = vld [vmem:[#allocation5 + $0x60] sm:$0xf]
    %v137 = vld [vmem:[#allocation7] sm:$0x1]
    %v139 = vperm.slane %v137, 0
    %vm141 = vcmask 818176
    %v143 = vsel %vm141, %v123, 0
    %vm145 = vcmask 1043456
    %v147 = vsel %vm145, %v136, 0
    %149 = vmatpush.msra.mxu0 0.0
    %150 = vmatpush.msra.mxu0 0.0
    %151 = vmatpush.msra.mxu0 0.0
    %152 = vmatpush.msra.mxu0 %v147
    %153 = vmatpush.msra.mxu0 %v135
    %154 = vmatpush.msra.mxu0 %v134
    %155 = vmatpush.msra.mxu0 %v133
    %156 = vmatpush.msra.mxu0 %v132
    %157 = vmatpush.msra.mxu0 %v131
    %158 = vmatpush.msra.mxu0 %v130
    %159 = vmatpush.msra.mxu0 %v129
    %160 = vmatpush.msra.mxu0 %v128
    %161 = vmatpush.msra.mxu0 %v127
    %162 = vmatpush.msra.mxu0 %v126
    %163 = vmatpush.msra.mxu0 %v125
    %164 = vmatpush.msra.mxu0 %v124
    %165 = vmatmul.f32.gmra.mxu0 %v143
    %v166 = vpop.f32.mrf.mxu0
    %v167 = vadd.f32 %v139, %v166
    %168 = vdwg.mxu0
    %v169 = vmax.f32 %v167, 0.0
    %v170 = vld [vmem:[#allocation8] sm:$0xff]
    %v171 = vld [vmem:[#allocation8 + $0x8] sm:$0xff]
    %v172 = vld [vmem:[#allocation8 + $0x10] sm:$0xff]
    %v173 = vld [vmem:[#allocation8 + $0x18] sm:$0xff]
    %v174 = vld [vmem:[#allocation8 + $0x20] sm:$0xff]
    %v175 = vld [vmem:[#allocation8 + $0x28] sm:$0xff]
    %v176 = vld [vmem:[#allocation8 + $0x30] sm:$0xff]
    %v177 = vld [vmem:[#allocation8 + $0x38] sm:$0xff]
    %v178 = vld [vmem:[#allocation8 + $0x40] sm:$0xff]
    %v179 = vld [vmem:[#allocation8 + $0x48] sm:$0xff]
    %v180 = vld [vmem:[#allocation8 + $0x50] sm:$0xff]
    %v181 = vld [vmem:[#allocation8 + $0x58] sm:$0xff]
    %v182 = vld [vmem:[#allocation8 + $0x60] sm:$0xff]
    %v183 = vld [vmem:[#allocation8 + $0x68] sm:$0xff]
    %v184 = vld [vmem:[#allocation8 + $0x70] sm:$0xff]
    %v185 = vld [vmem:[#allocation8 + $0x78] sm:$0xff]
    %v186 = vld [vmem:[%s4] sm:$0x1]
    %v188 = vperm.slane %v186, 0
    %190 = vmatpush.msra.mxu0 %v185
    %191 = vmatpush.msra.mxu0 %v184
    %192 = vmatpush.msra.mxu0 %v183
    %193 = vmatpush.msra.mxu0 %v182
    %194 = vmatpush.msra.mxu0 %v181
    %195 = vmatpush.msra.mxu0 %v180
    %196 = vmatpush.msra.mxu0 %v179
    %197 = vmatpush.msra.mxu0 %v178
    %198 = vmatpush.msra.mxu0 %v177
    %199 = vmatpush.msra.mxu0 %v176
    %200 = vmatpush.msra.mxu0 %v175
    %201 = vmatpush.msra.mxu0 %v174
    %202 = vmatpush.msra.mxu0 %v173
    %203 = vmatpush.msra.mxu0 %v172
    %204 = vmatpush.msra.mxu0 %v171
    %205 = vmatpush.msra.mxu0 %v170
    %206 = vmatmul.f32.gmra.mxu0 %v169
    %v207 = vpop.f32.mrf.mxu0
    %v208 = vadd.f32 %v188, %v207
    %209 = vdwg.mxu0
    %v210 = vmax.f32 %v208, 0.0
    %v211 = vld [vmem:[#allocation10] sm:$0xff]
    %v212 = vld [vmem:[#allocation10 + $0x8] sm:$0xff]
    %v213 = vld [vmem:[#allocation10 + $0x10] sm:$0xff]
    %v214 = vld [vmem:[#allocation10 + $0x18] sm:$0xff]
    %v215 = vld [vmem:[#allocation10 + $0x20] sm:$0xff]
    %v216 = vld [vmem:[#allocation10 + $0x28] sm:$0xff]
    %v217 = vld [vmem:[#allocation10 + $0x30] sm:$0xff]
    %v218 = vld [vmem:[#allocation10 + $0x38] sm:$0xff]
    %v219 = vld [vmem:[#allocation10 + $0x40] sm:$0xff]
    %v220 = vld [vmem:[#allocation10 + $0x48] sm:$0xff]
    %v221 = vld [vmem:[#allocation10 + $0x50] sm:$0xff]
    %v222 = vld [vmem:[#allocation10 + $0x58] sm:$0xff]
    %v223 = vld [vmem:[#allocation10 + $0x60] sm:$0xff]
    %v224 = vld [vmem:[#allocation10 + $0x68] sm:$0xff]
    %v225 = vld [vmem:[#allocation10 + $0x70] sm:$0xff]
    %v226 = vld [vmem:[#allocation10 + $0x78] sm:$0xff]
    %v227 = vld [vmem:[%s6] sm:$0x1]
    %v229 = vperm.slane %v227, 0
    %231 = vmatpush.msra.mxu0 %v226
    %232 = vmatpush.msra.mxu0 %v225
    %233 = vmatpush.msra.mxu0 %v224
    %234 = vmatpush.msra.mxu0 %v223
    %235 = vmatpush.msra.mxu0 %v222
    %236 = vmatpush.msra.mxu0 %v221
    %237 = vmatpush.msra.mxu0 %v220
    %238 = vmatpush.msra.mxu0 %v219
    %239 = vmatpush.msra.mxu0 %v218
    %240 = vmatpush.msra.mxu0 %v217
    %241 = vmatpush.msra.mxu0 %v216
    %242 = vmatpush.msra.mxu0 %v215
    %243 = vmatpush.msra.mxu0 %v214
    %244 = vmatpush.msra.mxu0 %v213
    %245 = vmatpush.msra.mxu0 %v212
    %246 = vmatpush.msra.mxu0 %v211
    %247 = vmatmul.f32.gmra.mxu0 %v210
    %v248 = vpop.f32.mrf.mxu0
    %v249 = vadd.f32 %v229, %v248
    %250 = vdwg.mxu0
    %v251 = vmax.f32 %v249, 0.0
    %v252 = vld [vmem:[#allocation11] sm:$0xff]
    %v253 = vld [vmem:[#allocation11 + $0x8] sm:$0xff]
    %v254 = vld [vmem:[#allocation11 + $0x10] sm:$0xff]
    %v255 = vld [vmem:[#allocation11 + $0x18] sm:$0xff]
    %v256 = vld [vmem:[#allocation11 + $0x20] sm:$0xff]
    %v257 = vld [vmem:[#allocation11 + $0x28] sm:$0xff]
    %v258 = vld [vmem:[#allocation11 + $0x30] sm:$0xff]
    %v259 = vld [vmem:[#allocation11 + $0x38] sm:$0xff]
    %v260 = vld [vmem:[#allocation11 + $0x40] sm:$0xff]
    %v261 = vld [vmem:[#allocation11 + $0x48] sm:$0xff]
    %v262 = vld [vmem:[#allocation11 + $0x50] sm:$0xff]
    %v263 = vld [vmem:[#allocation11 + $0x58] sm:$0xff]
    %v264 = vld [vmem:[#allocation11 + $0x60] sm:$0xff]
    %v265 = vld [vmem:[#allocation11 + $0x68] sm:$0xff]
    %v266 = vld [vmem:[#allocation11 + $0x70] sm:$0xff]
    %v267 = vld [vmem:[#allocation11 + $0x78] sm:$0xff]
    %v268 = vld [vmem:[%s8] sm:$0x1]
    %v270 = vperm.slane %v268, 0
    %272 = vmatpush.msra.mxu0 %v267
    %273 = vmatpush.msra.mxu0 %v266
    %274 = vmatpush.msra.mxu0 %v265
    %275 = vmatpush.msra.mxu0 %v264
    %276 = vmatpush.msra.mxu0 %v263
    %277 = vmatpush.msra.mxu0 %v262
    %278 = vmatpush.msra.mxu0 %v261
    %279 = vmatpush.msra.mxu0 %v260
    %280 = vmatpush.msra.mxu0 %v259
    %281 = vmatpush.msra.mxu0 %v258
    %282 = vmatpush.msra.mxu0 %v257
    %283 = vmatpush.msra.mxu0 %v256
    %284 = vmatpush.msra.mxu0 %v255
    %285 = vmatpush.msra.mxu0 %v254
    %286 = vmatpush.msra.mxu0 %v253
    %287 = vmatpush.msra.mxu0 %v252
    %288 = vmatmul.f32.gmra.mxu0 %v251
    %v289 = vpop.f32.mrf.mxu0
    %v290 = vadd.f32 %v270, %v289
    %291 = vdwg.mxu0
    %v292 = vadd.f32 %v123, %v290
    %293 = vst.msk [vmem:[#allocation13] sm:$0xff] %vm141, %v292
    // Predicated region
    $region62: #{pr_linear.1} parent=1 // pred_check
      _
    $region63: #{pr_linear.1} parent=1 // pred_check_branch
      %295 = sbr.rel (0) target = $region65
    $region64: #{pr_linear.1} parent=1 // pred_region
      %297 = vsyncadd [#allocation4], 0
      %s299 = sshll.u32 [#allocation13], 4
      %s300 = int_to_ptr.vmem [resolvable:$true] %s299
      %s301 = sshll.u32 %s9, 4
      %s302 = int_to_ptr.hbm [resolvable:$true] %s301
      %304 = dma.vmem_to_hbm [thread:$0]  %s300, 128, %s302, [#allocation4]
    $region65: #{pr_linear.1} parent=1 // pred_fallthru
      _
    // Predicated region
    $region66: #{pr_linear.1} parent=1 // pred_check
      _
    $region67: #{pr_linear.1} parent=1 // pred_check_branch
      %306 = sbr.rel (0) target = $region69
    $region68: #{pr_linear.1} parent=1 // pred_region
      %308 = dma.done [#allocation4], 128
    $region69: #{pr_linear.1} parent=1 // pred_fallthru
      _
    %309 = vsyncpa [#allocation3], 1
    %310 = vsyncpa [#allocation6], 1
    %311 = vsyncpa [#allocation9], 1
    %312 = vsyncpa [#allocation12], 1
    %313 = vsyncpa [#allocation4], 1

</llo_original>
